<compile_context>
chip_gen: v6e
topology: v6e:2x2x1
jax: 0.10.0
libtpu: 0.0.40
codegen_flags: <defaults>
</compile_context>

<pallas_src>
import functools

import jax
import jax.numpy as jnp
import numpy as np
from jax import lax
from jax.experimental import pallas as pl
from jax.experimental.pallas import tpu as pltpu

EPS = 1e-5


# ----------------------------- Pallas kernel --------------------------------
def _pixel_disc_kernel(x_ref, w1_ref, b1_ref, w2_ref, s_ref, t_ref, w3_ref,
                       o_ref, *, use_sigmoid, bf16_epilogue):
    """One grid step = one (C, TM) pixel slab of one image.

    x_ref : (1, Cin, TM)  f32     activations, pixels on the lane axis
    w1_ref: (ndf, Cin)    bf16    conv1 weight (spectral-normalized)
    b1_ref: (ndf, 1)      f32     conv1 bias
    w2_ref: (2ndf, ndf)   bf16    conv2 weight (spectral-normalized, no bias)
    s_ref : (2ndf, 1)     f32     folded BatchNorm scale
    t_ref : (2ndf, 1)     f32     folded BatchNorm shift
    w3_ref: (1, 2ndf)     bf16    conv3 weight (spectral-normalized, no bias)
    o_ref : (1, 1, TM)    f32     output (1 channel), lane-dense over pixels
    """
    act_dtype = jnp.bfloat16 if bf16_epilogue else jnp.float32
    x = x_ref[0].astype(jnp.bfloat16)                                   # (Cin, TM)

    # conv1 (1x1) + bias (f32 on accumulator) + LeakyReLU(0.2) in act_dtype
    h1 = jnp.dot(w1_ref[...], x, preferred_element_type=jnp.float32)   # (ndf, TM)
    h1 = (h1 + b1_ref[...]).astype(act_dtype)
    h1 = jnp.maximum(h1, 0.2 * h1)                                      # LeakyReLU
    h1 = h1.astype(jnp.bfloat16)

    # conv2 (1x1, no bias) + BatchNorm(eval, folded, f32) + LeakyReLU(0.2)
    h2 = jnp.dot(w2_ref[...], h1, preferred_element_type=jnp.float32)  # (2ndf, TM)
    h2 = (h2 * s_ref[...] + t_ref[...]).astype(act_dtype)
    h2 = jnp.maximum(h2, 0.2 * h2)
    h2 = h2.astype(jnp.bfloat16)

    # conv3 (1x1, no bias) -> 1 channel
    out = jnp.dot(w3_ref[...], h2, preferred_element_type=jnp.float32)  # (1, TM)
    if use_sigmoid:
        out = 1.0 / (1.0 + jnp.exp(-out))

    o_ref[0] = out


# --------------------------- parameter preparation --------------------------
def _spectral_normalize(w, n_iter=20):
    """Divide (Cout, Cin) weight by its largest singular value (power iteration
    with deterministic init) -- the forward-time effect of spectral_norm."""
    cout = w.shape[0]
    u0 = jnp.ones((cout,), jnp.float32) / jnp.sqrt(jnp.float32(cout))

    def body(_, u):
        v = w.T @ u
        v = v / (jnp.linalg.norm(v) + 1e-12)
        u = w @ v
        u = u / (jnp.linalg.norm(u) + 1e-12)
        return u

    u = lax.fori_loop(0, n_iter, body, u0)
    v = w.T @ u
    v = v / (jnp.linalg.norm(v) + 1e-12)
    sigma = u @ (w @ v)
    return w / sigma


def _prepare_params(p):
    """Spectral-normalize the conv weights and fold eval-mode BatchNorm."""
    w1 = _spectral_normalize(p["w1"].astype(jnp.float32))
    w2 = _spectral_normalize(p["w2"].astype(jnp.float32))
    w3 = _spectral_normalize(p["w3"].astype(jnp.float32))
    bn_scale = p["gamma"] * lax.rsqrt(p["running_var"] + EPS)
    bn_shift = p["beta"] - p["running_mean"] * bn_scale
    return w1, p["b1"].astype(jnp.float32), w2, bn_scale, bn_shift, w3


# ------------------------------ tiling helpers -------------------------------
def _cdiv(a, b):
    return -(-a // b)


def _pick_tile_pixels(P, N, target=4096, min_steps=8):
    """Lane-dense pixel tile: big enough to amortize per-step overhead, small
    enough to keep >= min_steps grid steps (v7x megacore + pipelining)."""
    tm = min(target, 128 * _cdiv(P, 128))
    tm = max(128, (tm // 128) * 128)
    while tm > 128 and N * _cdiv(P, tm) < min_steps:
        tm = max(128, ((tm // 2) // 128) * 128)
    return tm


def _vmem_limit_bytes(TM, Cin, ndf, ndf2):
    """Explicit VMEM budget (bytes) for one pipelined step, with 2x margin.
    Per pixel: 2x double-buffered x (f32) + 2x out (f32) + h1 (f32 acc + bf16)
    + h2 (f32 acc + bf16).  Clamped to stay under v7x's 64 MiB physical VMEM."""
    per_pixel = (2 * Cin * 4) + (2 * 1 * 4) + ndf * (4 + 2) + ndf2 * (4 + 2)
    weights = 2 * ((ndf * Cin + ndf2 * ndf + ndf2) * 2 + (ndf + 2 * ndf2) * 4)
    est = TM * per_pixel + weights + (1 << 20)          # +1 MiB slack
    return int(min(48 << 20, max(32 << 20, 2 * est)))


# ------------------------------- wrapper -------------------------------------
@functools.partial(jax.jit,
                   static_argnames=("use_sigmoid", "tile_pixels", "bf16_epilogue"))
def pixel_discriminator_forward(x_nchw, params, use_sigmoid=False,
                                tile_pixels=None, bf16_epilogue=True):
    """x_nchw: (N, input_nc, H, W) f32 -> (N, 1, H, W) f32.

    tile_pixels: pixel-tile size TM (multiple of 128); None = auto (target 4096,
                 worth sweeping 2048/4096/8192 at production image sizes).
    bf16_epilogue: do LeakyReLU / inter-layer casts in bf16 (best on v6e/v7x);
                 set False on v5e (no bf16 VPU).
    """
    N, Cin, H, W = x_nchw.shape
    w1, b1, w2, bn_scale, bn_shift, w3 = _prepare_params(params)
    ndf = w1.shape[0]
    ndf2 = w2.shape[0]

    P = H * W
    if tile_pixels is None:
        TM = _pick_tile_pixels(P, N)
    else:
        TM = max(128, (int(tile_pixels) // 128) * 128)
    n_tiles = _cdiv(P, TM)          # ragged last block handled by Pallas (no pad copy)

    x = x_nchw.reshape(N, Cin, P).astype(jnp.float32)

    kernel = functools.partial(_pixel_disc_kernel, use_sigmoid=use_sigmoid,
                               bf16_epilogue=bf16_epilogue)

    out = pl.pallas_call(
        kernel,
        out_shape=jax.ShapeDtypeStruct((N, 1, P), jnp.float32),
        grid_spec=pltpu.PrefetchScalarGridSpec(
            num_scalar_prefetch=0,
            grid=(N, n_tiles),
            in_specs=[
                pl.BlockSpec((1, Cin, TM), lambda n, t: (n, 0, t)),
                pl.BlockSpec((ndf, Cin), lambda n, t: (0, 0)),   # resident
                pl.BlockSpec((ndf, 1), lambda n, t: (0, 0)),     # resident
                pl.BlockSpec((ndf2, ndf), lambda n, t: (0, 0)),  # resident
                pl.BlockSpec((ndf2, 1), lambda n, t: (0, 0)),    # resident
                pl.BlockSpec((ndf2, 1), lambda n, t: (0, 0)),    # resident
                pl.BlockSpec((1, ndf2), lambda n, t: (0, 0)),    # resident
            ],
            out_specs=pl.BlockSpec((1, 1, TM), lambda n, t: (n, 0, t)),
        ),
        compiler_params=pltpu.CompilerParams(
            dimension_semantics=("parallel", "parallel"),
            vmem_limit_bytes=_vmem_limit_bytes(TM, Cin, ndf, ndf2)),
    )(
        x,
        w1.astype(jnp.bfloat16),
        b1.reshape(ndf, 1),
        w2.astype(jnp.bfloat16),
        bn_scale.reshape(ndf2, 1).astype(jnp.float32),
        bn_shift.reshape(ndf2, 1).astype(jnp.float32),
        w3.astype(jnp.bfloat16),
    )

    return out.reshape(N, 1, H, W)


# ---------------- pure-JAX reference (for correctness check) ----------------
def _reference(x_nchw, params, use_sigmoid=False):
    N, Cin, H, W = x_nchw.shape
    w1, b1, w2, bn_scale, bn_shift, w3 = _prepare_params(params)
    xf = x_nchw.reshape(N, Cin, H * W).astype(jnp.float32)

    h1 = jnp.einsum("oc,ncp->nop", w1, xf) + b1[None, :, None]
    h1 = jnp.where(h1 > 0, h1, 0.2 * h1)

    h2 = jnp.einsum("oc,ncp->nop", w2, h1)
    h2 = h2 * bn_scale[None, :, None] + bn_shift[None, :, None]
    h2 = jnp.where(h2 > 0, h2, 0.2 * h2)

    out = jnp.einsum("oc,ncp->nop", w3, h2)
    if use_sigmoid:
        out = jax.nn.sigmoid(out)
    return out.reshape(N, 1, H, W)


# --------------------------------- main --------------------------------------
if __name__ == "__main__":
    N, Cin, H, W = 2, 4, 16, 16          # batch=2, input_nc=4, spatial=16
    ndf = 64                              # module default
    ndf2 = 2 * ndf

    key = jax.random.PRNGKey(0)
    kx, kw1, kb1, kw2, kw3, kg, kb, km, kv = jax.random.split(key, 9)

    x = jax.random.normal(kx, (N, Cin, H, W), jnp.float32)

    # Synthetic parameters.  Conv weights are the (Cout, Cin, 1, 1) PyTorch
    # weights with the trailing 1x1 spatial dims squeezed.
    params = {
        "w1": jax.random.normal(kw1, (ndf, Cin), jnp.float32) * 0.1,
        "b1": jax.random.normal(kb1, (ndf,), jnp.float32) * 0.1,
        "w2": jax.random.normal(kw2, (ndf2, ndf), jnp.float32) * 0.1,
        "w3": jax.random.normal(kw3, (1, ndf2), jnp.float32) * 0.1,
        "gamma": 1.0 + 0.1 * jax.random.normal(kg, (ndf2,), jnp.float32),
        "beta": 0.1 * jax.random.normal(kb, (ndf2,), jnp.float32),
        "running_mean": 0.1 * jax.random.normal(km, (ndf2,), jnp.float32),
        "running_var": jax.random.uniform(kv, (ndf2,), jnp.float32, 0.5, 1.5),
    }

    out = jax.block_until_ready(pixel_discriminator_forward(x, params))
    ref = jax.block_until_ready(_reference(x, params))

    assert out.shape == (N, 1, H, W), out.shape
    # bf16 matmul inputs / bf16 epilogue with f32 accumulation -> looser tolerance.
    np.testing.assert_allclose(np.asarray(out), np.asarray(ref),
                               atol=2e-2, rtol=2e-2)
    print("KERNEL_OK")
</pallas_src>

<mosaic_0001>
module attributes {stable_mosaic.version = 11 : i64} {
  func.func @_pixel_disc_kernel(%arg0: i32, %arg1: i32, %arg2: memref<1x4x128xf32, #tpu.memory_space<vmem>>, %arg3: memref<64x4xbf16, #tpu.memory_space<vmem>>, %arg4: memref<64x1xf32, #tpu.memory_space<vmem>>, %arg5: memref<128x64xbf16, #tpu.memory_space<vmem>>, %arg6: memref<128x1xf32, #tpu.memory_space<vmem>>, %arg7: memref<128x1xf32, #tpu.memory_space<vmem>>, %arg8: memref<1x128xbf16, #tpu.memory_space<vmem>>, %arg9: memref<1x1x128xf32, #tpu.memory_space<vmem>>) attributes {dimension_semantics = [#tpu.dimension_semantics<parallel>, #tpu.dimension_semantics<parallel>], iteration_bounds = array<i64: 2, 2>, scalar_prefetch = 0 : i64, scratch_operands = 0 : i64, tpu.core_type = #tpu.core_type<tc>, window_params = [{transform_indices = @transform_0, window_bounds = array<i64: 1, 4, 128>}, {pipeline_mode = #tpu.pipeline_mode<synchronous>, transform_indices = @transform_1, window_bounds = array<i64: 64, 4>}, {pipeline_mode = #tpu.pipeline_mode<synchronous>, transform_indices = @transform_2, window_bounds = array<i64: 64, 1>}, {pipeline_mode = #tpu.pipeline_mode<synchronous>, transform_indices = @transform_3, window_bounds = array<i64: 128, 64>}, {pipeline_mode = #tpu.pipeline_mode<synchronous>, transform_indices = @transform_4, window_bounds = array<i64: 128, 1>}, {pipeline_mode = #tpu.pipeline_mode<synchronous>, transform_indices = @transform_5, window_bounds = array<i64: 128, 1>}, {pipeline_mode = #tpu.pipeline_mode<synchronous>, transform_indices = @transform_6, window_bounds = array<i64: 1, 128>}, {transform_indices = @transform_7, window_bounds = array<i64: 1, 1, 128>}]} {
    %c0 = arith.constant 0 : index
    %c0_0 = arith.constant 0 : index
    %c0_1 = arith.constant 0 : index
    %0 = vector.load %arg2[%c0, %c0_0, %c0_1] : memref<1x4x128xf32, #tpu.memory_space<vmem>>, vector<1x4x128xf32>
    %1 = vector.shape_cast %0 : vector<1x4x128xf32> to vector<4x128xf32>
    %2 = arith.truncf %1 : vector<4x128xf32> to vector<4x128xbf16>
    %c0_2 = arith.constant 0 : index
    %c0_3 = arith.constant 0 : index
    %3 = vector.load %arg3[%c0_2, %c0_3] : memref<64x4xbf16, #tpu.memory_space<vmem>>, vector<64x4xbf16>
    %cst = arith.constant dense<0.000000e+00> : vector<64x128xf32>
    %4 = tpu.matmul %3, %2, %cst {dimension_numbers = #tpu.dot_dimension_numbers<[1], [0], [0], [1], [0, 0, 1, 1], [], []>} : vector<64x4xbf16>, vector<4x128xbf16>, vector<64x128xf32> -> vector<64x128xf32>
    %c0_4 = arith.constant 0 : index
    %c0_5 = arith.constant 0 : index
    %5 = vector.load %arg4[%c0_4, %c0_5] : memref<64x1xf32, #tpu.memory_space<vmem>>, vector<64x1xf32>
    %6 = vector.broadcast %5 : vector<64x1xf32> to vector<64x128xf32>
    %7 = arith.addf %4, %6 : vector<64x128xf32>
    %8 = arith.truncf %7 : vector<64x128xf32> to vector<64x128xbf16>
    %cst_6 = arith.constant 2.001950e-01 : bf16
    %9 = vector.broadcast %cst_6 : bf16 to vector<64x128xbf16>
    %10 = arith.mulf %9, %8 : vector<64x128xbf16>
    %11 = arith.maximumf %8, %10 : vector<64x128xbf16>
    %c0_7 = arith.constant 0 : index
    %c0_8 = arith.constant 0 : index
    %12 = vector.load %arg5[%c0_7, %c0_8] : memref<128x64xbf16, #tpu.memory_space<vmem>>, vector<128x64xbf16>
    %cst_9 = arith.constant dense<0.000000e+00> : vector<128x128xf32>
    %13 = tpu.matmul %12, %11, %cst_9 {dimension_numbers = #tpu.dot_dimension_numbers<[1], [0], [0], [1], [0, 0, 1, 1], [], []>} : vector<128x64xbf16>, vector<64x128xbf16>, vector<128x128xf32> -> vector<128x128xf32>
    %c0_10 = arith.constant 0 : index
    %c0_11 = arith.constant 0 : index
    %14 = vector.load %arg6[%c0_10, %c0_11] : memref<128x1xf32, #tpu.memory_space<vmem>>, vector<128x1xf32>
    %15 = vector.broadcast %14 : vector<128x1xf32> to vector<128x128xf32>
    %16 = arith.mulf %13, %15 : vector<128x128xf32>
    %c0_12 = arith.constant 0 : index
    %c0_13 = arith.constant 0 : index
    %17 = vector.load %arg7[%c0_12, %c0_13] : memref<128x1xf32, #tpu.memory_space<vmem>>, vector<128x1xf32>
    %18 = vector.broadcast %17 : vector<128x1xf32> to vector<128x128xf32>
    %19 = arith.addf %16, %18 : vector<128x128xf32>
    %20 = arith.truncf %19 : vector<128x128xf32> to vector<128x128xbf16>
    %cst_14 = arith.constant 2.001950e-01 : bf16
    %21 = vector.broadcast %cst_14 : bf16 to vector<128x128xbf16>
    %22 = arith.mulf %21, %20 : vector<128x128xbf16>
    %23 = arith.maximumf %20, %22 : vector<128x128xbf16>
    %c0_15 = arith.constant 0 : index
    %c0_16 = arith.constant 0 : index
    %24 = vector.load %arg8[%c0_15, %c0_16] : memref<1x128xbf16, #tpu.memory_space<vmem>>, vector<1x128xbf16>
    %cst_17 = arith.constant dense<0.000000e+00> : vector<1x128xf32>
    %25 = tpu.matmul %24, %23, %cst_17 {dimension_numbers = #tpu.dot_dimension_numbers<[1], [0], [0], [1], [0, 0, 1, 1], [], []>} : vector<1x128xbf16>, vector<128x128xbf16>, vector<1x128xf32> -> vector<1x128xf32>
    %c0_18 = arith.constant 0 : index
    %c0_19 = arith.constant 0 : index
    %c0_20 = arith.constant 0 : index
    %26 = vector.load %arg9[%c0_18, %c0_19, %c0_20] : memref<1x1x128xf32, #tpu.memory_space<vmem>>, vector<1x1x128xf32>
    %27 = vector.shape_cast %26 : vector<1x1x128xf32> to vector<1x128xf32>
    %28 = vector.shape_cast %25 : vector<1x128xf32> to vector<1x1x128xf32>
    tpu.vector_store %arg9[%c0_18, %c0_19, %c0_20], %28 {strides = array<i32>} : memref<1x1x128xf32, #tpu.memory_space<vmem>>, vector<1x1x128xf32>,
    return
  }
  func.func @transform_0(%arg0: i32, %arg1: i32) -> (i32, i32, i32) {
    %c0_i32 = arith.constant 0 : i32
    %c0_i32_0 = arith.constant 0 : i32
    return %arg0, %c0_i32, %arg1 : i32, i32, i32
  }
  func.func @transform_1(%arg0: i32, %arg1: i32) -> (i32, i32) {
    %c0_i32 = arith.constant 0 : i32
    %c0_i32_0 = arith.constant 0 : i32
    %c0_i32_1 = arith.constant 0 : i32
    return %c0_i32, %c0_i32_0 : i32, i32
  }
  func.func @transform_2(%arg0: i32, %arg1: i32) -> (i32, i32) {
    %c0_i32 = arith.constant 0 : i32
    %c0_i32_0 = arith.constant 0 : i32
    %c0_i32_1 = arith.constant 0 : i32
    return %c0_i32, %c0_i32_0 : i32, i32
  }
  func.func @transform_3(%arg0: i32, %arg1: i32) -> (i32, i32) {
    %c0_i32 = arith.constant 0 : i32
    %c0_i32_0 = arith.constant 0 : i32
    %c0_i32_1 = arith.constant 0 : i32
    return %c0_i32, %c0_i32_0 : i32, i32
  }
  func.func @transform_4(%arg0: i32, %arg1: i32) -> (i32, i32) {
    %c0_i32 = arith.constant 0 : i32
    %c0_i32_0 = arith.constant 0 : i32
    %c0_i32_1 = arith.constant 0 : i32
    return %c0_i32, %c0_i32_0 : i32, i32
  }
  func.func @transform_5(%arg0: i32, %arg1: i32) -> (i32, i32) {
    %c0_i32 = arith.constant 0 : i32
    %c0_i32_0 = arith.constant 0 : i32
    %c0_i32_1 = arith.constant 0 : i32
    return %c0_i32, %c0_i32_0 : i32, i32
  }
  func.func @transform_6(%arg0: i32, %arg1: i32) -> (i32, i32) {
    %c0_i32 = arith.constant 0 : i32
    %c0_i32_0 = arith.constant 0 : i32
    %c0_i32_1 = arith.constant 0 : i32
    return %c0_i32, %c0_i32_0 : i32, i32
  }
  func.func @transform_7(%arg0: i32, %arg1: i32) -> (i32, i32, i32) {
    %c0_i32 = arith.constant 0 : i32
    %c0_i32_0 = arith.constant 0 : i32
    return %arg0, %c0_i32, %arg1 : i32, i32, i32
  }
}

</mosaic_0001>

<llo_original>
// kernel: custom-call.1
$region0: #{custom-call.1}
  %s0 = inlined_call_operand.vmem [shape: f32[128], index: 0, kind: output, shape index: {}]

// kernel: custom-call
$region0: #{custom-call}
  %s0 = inlined_call_operand.vmem [shape: f32[64], index: 0, kind: output, shape index: {}]

// kernel: pixel_discriminator_forward.1
$region0: #{pixel_discriminator_forward.1}
  #allocation0 [shape = 'u32[]', space=smem, size = 0x4, offset = 0x4, fixed_abs, tag = 'smem constant byte address 0x4 - core index']
  #allocation1 [shape = 'u32[144,128]{1,0:T(1,128)}', space=vmem, size = 0x12000, scoped, tag = 'internal scratch']
  %s0 = inlined_call_operand.vmem [shape: f32[2,4,256], index: 0, kind: input, shape index: {}]
  %s1 = inlined_call_operand.vmem [shape: bf16[64,4], index: 1, kind: input, shape index: {}]
  %s2 = inlined_call_operand.vmem [shape: f32[64,1], index: 2, kind: input, shape index: {}]
  %s3 = inlined_call_operand.vmem [shape: bf16[128,64], index: 3, kind: input, shape index: {}]
  %s4 = inlined_call_operand.vmem [shape: f32[128,1], index: 4, kind: input, shape index: {}]
  %s5 = inlined_call_operand.vmem [shape: f32[128,1], index: 5, kind: input, shape index: {}]
  %s6 = inlined_call_operand.vmem [shape: bf16[1,128], index: 6, kind: input, shape index: {}]
  %s7 = inlined_call_operand.vmem [shape: f32[2,1,256], index: 7, kind: output, shape index: {}]
  %s8 = sld [smem:[#allocation0]]
  $region61: #{pixel_discriminator_forward.1} parent=0
    _
  %s10 = ssub.s32 1, %s8
  %s11 = scalar_select 0, %s10, %s8
  loop: start=0, step=1, limit=6
  $region2: #{pixel_discriminator_forward.1} parent=0 // loop_pre_header
    _
  $region3: #{pixel_discriminator_forward.1} parent=0 // loop_header
    %s13 = sphi 0, %s17
    %p14 = scmp.ge.s32.totalorder %s13, 6
    %s20 = sphi 0, %s32
    %s21 = sphi 0, %s28
    %s22 = sphi 0, %s20
    %s23 = sphi 0, %s21
    %s24 = sphi 0, %s22
    %s25 = sphi 0, %s23
    %s37 = sphi 0, %s39
    %s40 = sphi 0, %s37
    %s41 = sphi 0, %s40
    %s57 = sphi 0, %s41
    %s61 = sphi 0, %s61
    %s63 = sphi 0, %s61
    %s64 = sphi 0, %s63
    %s78 = sphi 0, %s64
    %s82 = sphi 0, %s82
    %s84 = sphi 0, %s82
    %s85 = sphi 0, %s84
    %s99 = sphi 0, %s85
    %s103 = sphi 0, %s103
    %s105 = sphi 0, %s103
    %s106 = sphi 0, %s105
    %s120 = sphi 0, %s106
    %s124 = sphi 0, %s124
    %s126 = sphi 0, %s124
    %s127 = sphi 0, %s126
    %s141 = sphi 0, %s127
    %s145 = sphi 0, %s145
    %s147 = sphi 0, %s145
    %s148 = sphi 0, %s147
    %s162 = sphi 0, %s148
    %s166 = sphi 0, %s166
    %s168 = sphi 0, %s166
    %s169 = sphi 0, %s168
    %s183 = sphi 0, %s169
    %s191 = sphi 0, %s193
    %s194 = sphi 0, %s191
    %s195 = sphi 0, %s194
    %s211 = sphi 0, %s195
  $region4: #{pixel_discriminator_forward.1} parent=0 // loop_header_branch
    %16 = sbr.rel (%p14) target = $region8
  $region5: #{pixel_discriminator_forward.1} parent=0 // loop_body
    %s18 = ssub.s32 %s13, 1
    %s19 = ssub.s32 %s13, 2
    %s26 = sadd.s32 1, %s21
    %p27 = scmp.ge.s32.totalorder %s26, 2
    %s28 = scalar_select %p27, 0, %s26
    %s29 = sadd.s32 1, %s20
    %s30 = scalar_select %p27, %s29, %s20
    %p31 = scmp.ge.s32.totalorder %s30, 2
    %s32 = scalar_select %p31, 0, %s30
    %s33 = ssub.s32 %s20, %s32
    %s34 = ssub.s32 %s21, %s28
    %s35 = sor.u32 %s33, %s34
    %p36 = scmp.eq.s32.totalorder %s35, 0
    %s38 = sadd.s32 %s37, 1
    %s39 = scalar_select %p36, %s37, %s38
    %p42 = pneg %p36
    %p43 = scmp.eq.s32.totalorder %s13, 3
    %p44 = por %p42, %p43
    %p45 = scmp.ne.s32.totalorder %s37, %s40
    %p46 = scmp.eq.s32.totalorder %s13, 0
    %p47 = por %p45, %p46
    %p48 = scmp.ne.s32.totalorder %s37, %s40
    %p49 = scmp.eq.s32.totalorder %s18, 3
    %p50 = por %p48, %p49
    %p51 = scmp.ne.s32.totalorder %s40, %s41
    %p52 = scmp.eq.s32.totalorder %s18, 0
    %p53 = por %p51, %p52
    %p54 = scmp.ne.s32.totalorder %s40, %s41
    %p55 = scmp.eq.s32.totalorder %s19, 3
    %p56 = por %p54, %p55
    %p58 = scmp.ne.s32.totalorder %s41, %s57
    %p59 = scmp.eq.s32.totalorder %s19, 0
    %p60 = por %p58, %p59
    %s62 = sadd.s32 %s61, 1
    %p65 = scmp.eq.s32.totalorder %s13, 3
    %p66 = scmp.ne.s32.totalorder %s61, %s63
    %p67 = scmp.eq.s32.totalorder %s13, 0
    %p68 = por %p66, %p67
    %p69 = scmp.ne.s32.totalorder %s61, %s63
    %p70 = scmp.eq.s32.totalorder %s18, 3
    %p71 = por %p69, %p70
    %p72 = scmp.ne.s32.totalorder %s63, %s64
    %p73 = scmp.eq.s32.totalorder %s18, 0
    %p74 = por %p72, %p73
    %p75 = scmp.ne.s32.totalorder %s63, %s64
    %p76 = scmp.eq.s32.totalorder %s19, 3
    %p77 = por %p75, %p76
    %p79 = scmp.ne.s32.totalorder %s64, %s78
    %p80 = scmp.eq.s32.totalorder %s19, 0
    %p81 = por %p79, %p80
    %s83 = sadd.s32 %s82, 1
    %p86 = scmp.eq.s32.totalorder %s13, 3
    %p87 = scmp.ne.s32.totalorder %s82, %s84
    %p88 = scmp.eq.s32.totalorder %s13, 0
    %p89 = por %p87, %p88
    %p90 = scmp.ne.s32.totalorder %s82, %s84
    %p91 = scmp.eq.s32.totalorder %s18, 3
    %p92 = por %p90, %p91
    %p93 = scmp.ne.s32.totalorder %s84, %s85
    %p94 = scmp.eq.s32.totalorder %s18, 0
    %p95 = por %p93, %p94
    %p96 = scmp.ne.s32.totalorder %s84, %s85
    %p97 = scmp.eq.s32.totalorder %s19, 3
    %p98 = por %p96, %p97
    %p100 = scmp.ne.s32.totalorder %s85, %s99
    %p101 = scmp.eq.s32.totalorder %s19, 0
    %p102 = por %p100, %p101
    %s104 = sadd.s32 %s103, 1
    %p107 = scmp.eq.s32.totalorder %s13, 3
    %p108 = scmp.ne.s32.totalorder %s103, %s105
    %p109 = scmp.eq.s32.totalorder %s13, 0
    %p110 = por %p108, %p109
    %p111 = scmp.ne.s32.totalorder %s103, %s105
    %p112 = scmp.eq.s32.totalorder %s18, 3
    %p113 = por %p111, %p112
    %p114 = scmp.ne.s32.totalorder %s105, %s106
    %p115 = scmp.eq.s32.totalorder %s18, 0
    %p116 = por %p114, %p115
    %p117 = scmp.ne.s32.totalorder %s105, %s106
    %p118 = scmp.eq.s32.totalorder %s19, 3
    %p119 = por %p117, %p118
    %p121 = scmp.ne.s32.totalorder %s106, %s120
    %p122 = scmp.eq.s32.totalorder %s19, 0
    %p123 = por %p121, %p122
    %s125 = sadd.s32 %s124, 1
    %p128 = scmp.eq.s32.totalorder %s13, 3
    %p129 = scmp.ne.s32.totalorder %s124, %s126
    %p130 = scmp.eq.s32.totalorder %s13, 0
    %p131 = por %p129, %p130
    %p132 = scmp.ne.s32.totalorder %s124, %s126
    %p133 = scmp.eq.s32.totalorder %s18, 3
    %p134 = por %p132, %p133
    %p135 = scmp.ne.s32.totalorder %s126, %s127
    %p136 = scmp.eq.s32.totalorder %s18, 0
    %p137 = por %p135, %p136
    %p138 = scmp.ne.s32.totalorder %s126, %s127
    %p139 = scmp.eq.s32.totalorder %s19, 3
    %p140 = por %p138, %p139
    %p142 = scmp.ne.s32.totalorder %s127, %s141
    %p143 = scmp.eq.s32.totalorder %s19, 0
    %p144 = por %p142, %p143
    %s146 = sadd.s32 %s145, 1
    %p149 = scmp.eq.s32.totalorder %s13, 3
    %p150 = scmp.ne.s32.totalorder %s145, %s147
    %p151 = scmp.eq.s32.totalorder %s13, 0
    %p152 = por %p150, %p151
    %p153 = scmp.ne.s32.totalorder %s145, %s147
    %p154 = scmp.eq.s32.totalorder %s18, 3
    %p155 = por %p153, %p154
    %p156 = scmp.ne.s32.totalorder %s147, %s148
    %p157 = scmp.eq.s32.totalorder %s18, 0
    %p158 = por %p156, %p157
    %p159 = scmp.ne.s32.totalorder %s147, %s148
    %p160 = scmp.eq.s32.totalorder %s19, 3
    %p161 = por %p159, %p160
    %p163 = scmp.ne.s32.totalorder %s148, %s162
    %p164 = scmp.eq.s32.totalorder %s19, 0
    %p165 = por %p163, %p164
    %s167 = sadd.s32 %s166, 1
    %p170 = scmp.eq.s32.totalorder %s13, 3
    %p171 = scmp.ne.s32.totalorder %s166, %s168
    %p172 = scmp.eq.s32.totalorder %s13, 0
    %p173 = por %p171, %p172
    %p174 = scmp.ne.s32.totalorder %s166, %s168
    %p175 = scmp.eq.s32.totalorder %s18, 3
    %p176 = por %p174, %p175
    %p177 = scmp.ne.s32.totalorder %s168, %s169
    %p178 = scmp.eq.s32.totalorder %s18, 0
    %p179 = por %p177, %p178
    %p180 = scmp.ne.s32.totalorder %s168, %s169
    %p181 = scmp.eq.s32.totalorder %s19, 3
    %p182 = por %p180, %p181
    %p184 = scmp.ne.s32.totalorder %s169, %s183
    %p185 = scmp.eq.s32.totalorder %s19, 0
    %p186 = por %p184, %p185
    %s187 = ssub.s32 %s20, %s32
    %s188 = ssub.s32 %s21, %s28
    %s189 = sor.u32 %s187, %s188
    %p190 = scmp.eq.s32.totalorder %s189, 0
    %s192 = sadd.s32 %s191, 1
    %s193 = scalar_select %p190, %s191, %s192
    %p196 = pneg %p190
    %p197 = scmp.eq.s32.totalorder %s13, 3
    %p198 = por %p196, %p197
    %p199 = scmp.ne.s32.totalorder %s191, %s194
    %p200 = scmp.eq.s32.totalorder %s13, 0
    %p201 = por %p199, %p200
    %p202 = scmp.ne.s32.totalorder %s191, %s194
    %p203 = scmp.eq.s32.totalorder %s18, 3
    %p204 = por %p202, %p203
    %p205 = scmp.ne.s32.totalorder %s194, %s195
    %p206 = scmp.eq.s32.totalorder %s18, 0
    %p207 = por %p205, %p206
    %p208 = scmp.ne.s32.totalorder %s194, %s195
    %p209 = scmp.eq.s32.totalorder %s19, 3
    %p210 = por %p208, %p209
    %p212 = scmp.ne.s32.totalorder %s195, %s211
    %p213 = scmp.eq.s32.totalorder %s19, 0
    %p214 = por %p212, %p213
    %p215 = scmp.le.s32.totalorder 1, %s13
    %p216 = scmp.lt.s32.totalorder %s13, 5
    %p217 = pnand %p215, %p216
    %p218 = pneg %p217
    // Predicated region
    $region9: #{pixel_discriminator_forward.1} parent=5 // pred_check
      _
    $region10: #{pixel_discriminator_forward.1} parent=5 // pred_check_branch
      %220 = sbr.rel (%p217) target = $region12
    $region11: #{pixel_discriminator_forward.1} parent=5 // pred_region
      %s221 = ssub.s32 %s13, 1
      // Predicated region
      $region13: #{pixel_discriminator_forward.1} parent=11 // pred_check
        %p222 = pneg %p74
      $region14: #{pixel_discriminator_forward.1} parent=11 // pred_check_branch
        %224 = sbr.rel (%p222) target = $region16
      $region15: #{pixel_discriminator_forward.1} parent=11 // pred_region
        _
      $region16: #{pixel_discriminator_forward.1} parent=11 // pred_fallthru
        _
      // Predicated region
      $region17: #{pixel_discriminator_forward.1} parent=11 // pred_check
        %p225 = pneg %p95
      $region18: #{pixel_discriminator_forward.1} parent=11 // pred_check_branch
        %227 = sbr.rel (%p225) target = $region20
      $region19: #{pixel_discriminator_forward.1} parent=11 // pred_region
        _
      $region20: #{pixel_discriminator_forward.1} parent=11 // pred_fallthru
        _
      // Predicated region
      $region21: #{pixel_discriminator_forward.1} parent=11 // pred_check
        %p228 = pneg %p116
      $region22: #{pixel_discriminator_forward.1} parent=11 // pred_check_branch
        %230 = sbr.rel (%p228) target = $region24
      $region23: #{pixel_discriminator_forward.1} parent=11 // pred_region
        _
      $region24: #{pixel_discriminator_forward.1} parent=11 // pred_fallthru
        _
      // Predicated region
      $region25: #{pixel_discriminator_forward.1} parent=11 // pred_check
        %p231 = pneg %p137
      $region26: #{pixel_discriminator_forward.1} parent=11 // pred_check_branch
        %233 = sbr.rel (%p231) target = $region28
      $region27: #{pixel_discriminator_forward.1} parent=11 // pred_region
        _
      $region28: #{pixel_discriminator_forward.1} parent=11 // pred_fallthru
        _
      // Predicated region
      $region29: #{pixel_discriminator_forward.1} parent=11 // pred_check
        %p234 = pneg %p158
      $region30: #{pixel_discriminator_forward.1} parent=11 // pred_check_branch
        %236 = sbr.rel (%p234) target = $region32
      $region31: #{pixel_discriminator_forward.1} parent=11 // pred_region
        _
      $region32: #{pixel_discriminator_forward.1} parent=11 // pred_fallthru
        _
      // Predicated region
      $region33: #{pixel_discriminator_forward.1} parent=11 // pred_check
        %p237 = pneg %p179
      $region34: #{pixel_discriminator_forward.1} parent=11 // pred_check_branch
        %239 = sbr.rel (%p237) target = $region36
      $region35: #{pixel_discriminator_forward.1} parent=11 // pred_region
        _
      $region36: #{pixel_discriminator_forward.1} parent=11 // pred_fallthru
        _
    $region12: #{pixel_discriminator_forward.1} parent=5 // pred_fallthru
      _
    %p240 = scmp.lt.s32.totalorder %s13, 4
    // Predicated region
    $region37: #{pixel_discriminator_forward.1} parent=5 // pred_check
      %p241 = pneg %p240
    $region38: #{pixel_discriminator_forward.1} parent=5 // pred_check_branch
      %243 = sbr.rel (%p241) target = $region40
    $region39: #{pixel_discriminator_forward.1} parent=5 // pred_region
      // Predicated region
      $region41: #{pixel_discriminator_forward.1} parent=39 // pred_check
        %p244 = pneg %p47
      $region42: #{pixel_discriminator_forward.1} parent=39 // pred_check_branch
        %246 = sbr.rel (%p244) target = $region44
      $region43: #{pixel_discriminator_forward.1} parent=39 // pred_region
        %p247 = scmp.lt.s32.totalorder %s20, 1
        %s248 = scalar_select %p247, %s20, 1
        %p249 = scmp.lt.s32.totalorder %s21, 1
        %s250 = scalar_select %p249, %s21, 1
        %s251 = smul.addr %s248, 2
        %s252 = sadd.s32 %s250, %s251
        %s253 = smul.addr %s252, 4
        %s254 = scalar_lea.vmem %s0, %s253
      $region44: #{pixel_discriminator_forward.1} parent=39 // pred_fallthru
        _
    $region40: #{pixel_discriminator_forward.1} parent=5 // pred_fallthru
      _
    %p255 = scmp.le.s32.totalorder 1, %s13
    %p256 = scmp.lt.s32.totalorder %s13, 5
    %p257 = pnand %p255, %p256
    %p258 = pneg %p257
    // Predicated region
    $region45: #{pixel_discriminator_forward.1} parent=5 // pred_check
      _
    $region46: #{pixel_discriminator_forward.1} parent=5 // pred_check_branch
      %260 = sbr.rel (%p257) target = $region48
    $region47: #{pixel_discriminator_forward.1} parent=5 // pred_region
      %s261 = ssub.s32 %s13, 1
      %p262 = scmp.lt.s32.totalorder %s22, 1
      %s263 = scalar_select %p262, %s22, 1
      %p264 = scmp.lt.s32.totalorder %s23, 1
      %s265 = scalar_select %p264, %s23, 1
      %s266 = smul.addr %s263, 2
      %s267 = sadd.s32 %s265, %s266
      %s268 = smul.addr %s267, 4
      %s269 = scalar_lea.vmem %s0, %s268
      %p270 = pneg %p53
      %p271 = pneg %p50
      %p272 = pneg %p74
      %p273 = pneg %p71
      %p274 = pneg %p95
      %p275 = pneg %p92
      %p276 = pneg %p116
      %p277 = pneg %p113
      %p278 = pneg %p137
      %p279 = pneg %p134
      %p280 = pneg %p158
      %p281 = pneg %p155
      %p282 = pneg %p179
      %p283 = pneg %p176
      %p284 = pneg %p207
      %p285 = pneg %p204
      %p286 = scmp.lt.s32.totalorder %s22, 1
      %s287 = scalar_select %p286, %s22, 1
      %p288 = scmp.lt.s32.totalorder %s23, 1
      %s289 = scalar_select %p288, %s23, 1
      %s290 = smul.addr %s287, 2
      %s291 = sadd.s32 %s289, %s290
      %s292 = scalar_lea.vmem %s7, %s291
      %p293 = scmp.lt.s32.totalorder %s22, 1
      %s294 = scalar_select %p293, %s22, 1
      %p295 = scmp.lt.s32.totalorder %s23, 1
      %s296 = scalar_select %p295, %s23, 1
      %s297 = smul.addr %s294, 2
      %s298 = sadd.s32 %s296, %s297
      %s299 = smul.addr %s298, 4
      %s300 = scalar_lea.vmem %s0, %s299
      %p301 = scmp.lt.s32.totalorder %s22, 1
      %s302 = scalar_select %p301, %s22, 1
      %p303 = scmp.lt.s32.totalorder %s23, 1
      %s304 = scalar_select %p303, %s23, 1
      %s305 = smul.addr %s302, 2
      %s306 = sadd.s32 %s304, %s305
      %s307 = scalar_lea.vmem %s7, %s306
      %v310 = vld [vmem:[%s300] sm:$0xf]
      %v311 = vpack.c.bf16 %v310, %v310
      %v312 = vld [vmem:[%s1] sm:$0xf]
      %v313 = vld [vmem:[%s1 + $0x4] sm:$0xf]
      %v314 = vld [vmem:[%s1 + $0x8] sm:$0xf]
      %v315 = vld [vmem:[%s1 + $0xc] sm:$0xf]
      %v316 = vld [vmem:[%s1 + $0x10] sm:$0xf]
      %v317 = vld [vmem:[%s1 + $0x14] sm:$0xf]
      %v318 = vld [vmem:[%s1 + $0x18] sm:$0xf]
      %v319 = vld [vmem:[%s1 + $0x1c] sm:$0xf]
      %v320 = vld [vmem:[%s2] sm:$0xff]
      %v321 = vld [vmem:[%s2 + $0x8] sm:$0xff]
      %v322 = vld [vmem:[%s2 + $0x10] sm:$0xff]
      %v323 = vld [vmem:[%s2 + $0x18] sm:$0xff]
      %v324 = vld [vmem:[%s2 + $0x20] sm:$0xff]
      %v325 = vld [vmem:[%s2 + $0x28] sm:$0xff]
      %v326 = vld [vmem:[%s2 + $0x30] sm:$0xff]
      %v327 = vld [vmem:[%s2 + $0x38] sm:$0xff]
      %329 = vset.pattern.permute.xlu0 0
      %330 = vperm.xlu0 %329, %v320
      %v331 = vpop.permute.xlu0 %330
      %334 = vset.pattern.permute.xlu0 0
      %335 = vperm.xlu0 %334, %v321
      %v336 = vpop.permute.xlu0 %335
      %339 = vset.pattern.permute.xlu0 0
      %340 = vperm.xlu0 %339, %v322
      %v341 = vpop.permute.xlu0 %340
      %344 = vset.pattern.permute.xlu0 0
      %345 = vperm.xlu0 %344, %v323
      %v346 = vpop.permute.xlu0 %345
      %349 = vset.pattern.permute.xlu0 0
      %350 = vperm.xlu0 %349, %v324
      %v351 = vpop.permute.xlu0 %350
      %354 = vset.pattern.permute.xlu0 0
      %355 = vperm.xlu0 %354, %v325
      %v356 = vpop.permute.xlu0 %355
      %359 = vset.pattern.permute.xlu0 0
      %360 = vperm.xlu0 %359, %v326
      %v361 = vpop.permute.xlu0 %360
      %364 = vset.pattern.permute.xlu0 0
      %365 = vperm.xlu0 %364, %v327
      %v366 = vpop.permute.xlu0 %365
      %v376 = vunpack.c.l.b16 %v312
      %v377 = vunpack.c.l.b16 %v313
      %v378 = vunpack.c.l.b16 %v314
      %v379 = vunpack.c.l.b16 %v315
      %v380 = vunpack.c.l.b16 %v316
      %v381 = vunpack.c.l.b16 %v317
      %v382 = vunpack.c.l.b16 %v318
      %v383 = vunpack.c.l.b16 %v319
      %v384 = vpack.c.b16 %v377, %v376
      %v385 = vpack.c.b16 %v379, %v378
      %v386 = vpack.c.b16 %v381, %v380
      %v387 = vpack.c.b16 %v383, %v382
      %vm388 = vcmask 31744
      %v390 = vsel %vm388, %v384, 0
      %v393 = vsel %vm388, %v385, 0
      %v396 = vsel %vm388, %v386, 0
      %v399 = vsel %vm388, %v387, 0
      %vm401 = vcmask 1041408
      %v403 = vsel %vm401, %v311, 0
      %405 = vmatprep.subr.bf16.mxu0 0
      %406 = vmatpush1.bf16.msra.mxu0 0
      %407 = vmatprep.subr.bf16.mxu0 0
      %408 = vmatpush1.bf16.msra.mxu0 0
      %409 = vmatprep.subr.bf16.mxu0 0
      %410 = vmatpush1.bf16.msra.mxu0 0
      %411 = vmatprep.subr.bf16.mxu0 0
      %412 = vmatpush1.bf16.msra.mxu0 0
      %413 = vmatprep.subr.bf16.mxu0 0
      %414 = vmatpush1.bf16.msra.mxu0 0
      %415 = vmatprep.subr.bf16.mxu0 0
      %416 = vmatpush1.bf16.msra.mxu0 0
      %417 = vmatprep.subr.bf16.mxu0 0
      %418 = vmatpush1.bf16.msra.mxu0 0
      %419 = vmatprep.subr.bf16.mxu0 0
      %420 = vmatpush1.bf16.msra.mxu0 %v403
      %421 = vmatprep.subr.bf16.mxu0 0
      %422 = vmatpush2.bf16.msra.mxu0 0
      %423 = vmatprep.subr.bf16.mxu0 0
      %424 = vmatpush2.bf16.msra.mxu0 0
      %425 = vmatprep.subr.bf16.mxu0 0
      %426 = vmatpush2.bf16.msra.mxu0 0
      %427 = vmatprep.subr.bf16.mxu0 0
      %428 = vmatpush2.bf16.msra.mxu0 0
      %429 = vmatprep.subr.bf16.mxu0 0
      %430 = vmatpush2.bf16.msra.mxu0 0
      %431 = vmatprep.subr.bf16.mxu0 0
      %432 = vmatpush2.bf16.msra.mxu0 0
      %433 = vmatprep.subr.bf16.mxu0 0
      %434 = vmatpush2.bf16.msra.mxu0 0
      %435 = vmatprep.subr.bf16.mxu0 0
      %436 = vmatpush2.bf16.msra.mxu0 0
      %437 = vmatprep.mubr.bf16.mxu0 0
      %438 = vmatmul.mubr.bf16.gmra.mxu0 %v390
      %v439 = vpop.f32.mrf.mxu0
      %v440 = vadd.f32 %v331, %v439
      %v441 = vpop.f32.mrf.mxu0
      %v442 = vpop.f32.mrf.mxu0
      %v443 = vadd.f32 %v336, %v442
      %v444 = vpop.f32.mrf.mxu0
      %445 = vmatprep.mubr.bf16.mxu0 0
      %446 = vmatmul.mubr.bf16.gmra.mxu0 %v393
      %v447 = vpop.f32.mrf.mxu0
      %v448 = vadd.f32 %v341, %v447
      %v449 = vpop.f32.mrf.mxu0
      %v450 = vpop.f32.mrf.mxu0
      %v451 = vadd.f32 %v346, %v450
      %v452 = vpop.f32.mrf.mxu0
      %453 = vmatprep.mubr.bf16.mxu0 0
      %454 = vmatmul.mubr.bf16.gmra.mxu0 %v396
      %v455 = vpop.f32.mrf.mxu0
      %v456 = vadd.f32 %v351, %v455
      %v457 = vpop.f32.mrf.mxu0
      %v458 = vpop.f32.mrf.mxu0
      %v459 = vadd.f32 %v356, %v458
      %v460 = vpop.f32.mrf.mxu0
      %461 = vmatprep.mubr.bf16.mxu0 0
      %462 = vmatmul.mubr.bf16.gmra.mxu0 %v399
      %v463 = vpop.f32.mrf.mxu0
      %v464 = vadd.f32 %v361, %v463
      %v465 = vpop.f32.mrf.mxu0
      %v466 = vpop.f32.mrf.mxu0
      %v467 = vadd.f32 %v366, %v466
      %v468 = vpop.f32.mrf.mxu0
      %469 = vdwg.mxu0
      %v470 = vpack.c.bf16 %v443, %v440
      %v471 = vpack.c.bf16 %v451, %v448
      %v472 = vpack.c.bf16 %v459, %v456
      %v473 = vpack.c.bf16 %v467, %v464
      %v474 = vmul.bf16 %v470, 1045249613
      %v475 = vmul.bf16 %v471, 1045249613
      %v476 = vmul.bf16 %v472, 1045249613
      %v477 = vmul.bf16 %v473, 1045249613
      %v478 = vmax.bf16 %v470, %v474
      %v479 = vmax.bf16 %v471, %v475
      %v480 = vmax.bf16 %v472, %v476
      %v481 = vmax.bf16 %v473, %v477
      %v482 = vld [vmem:[%s3] sm:$0xf]
      %v483 = vld [vmem:[%s3 + $0x4] sm:$0xf]
      %v484 = vld [vmem:[%s3 + $0x8] sm:$0xf]
      %v485 = vld [vmem:[%s3 + $0xc] sm:$0xf]
      %v486 = vld [vmem:[%s3 + $0x10] sm:$0xf]
      %v487 = vld [vmem:[%s3 + $0x14] sm:$0xf]
      %v488 = vld [vmem:[%s3 + $0x18] sm:$0xf]
      %v489 = vld [vmem:[%s3 + $0x1c] sm:$0xf]
      %v490 = vld [vmem:[%s3 + $0x20] sm:$0xf]
      %v491 = vld [vmem:[%s3 + $0x24] sm:$0xf]
      %v492 = vld [vmem:[%s3 + $0x28] sm:$0xf]
      %v493 = vld [vmem:[%s3 + $0x2c] sm:$0xf]
      %v494 = vld [vmem:[%s3 + $0x30] sm:$0xf]
      %v495 = vld [vmem:[%s3 + $0x34] sm:$0xf]
      %v496 = vld [vmem:[%s3 + $0x38] sm:$0xf]
      %v497 = vld [vmem:[%s3 + $0x3c] sm:$0xf]
      %v514 = vunpack.c.l.b16 %v482
      %v515 = vunpack.c.l.b16 %v483
      %v516 = vunpack.c.l.b16 %v484
      %v517 = vunpack.c.l.b16 %v485
      %v518 = vunpack.c.l.b16 %v486
      %v519 = vunpack.c.l.b16 %v487
      %v520 = vunpack.c.l.b16 %v488
      %v521 = vunpack.c.l.b16 %v489
      %v522 = vunpack.c.l.b16 %v490
      %v523 = vunpack.c.l.b16 %v491
      %v524 = vunpack.c.l.b16 %v492
      %v525 = vunpack.c.l.b16 %v493
      %v526 = vunpack.c.l.b16 %v494
      %v527 = vunpack.c.l.b16 %v495
      %v528 = vunpack.c.l.b16 %v496
      %v529 = vunpack.c.l.b16 %v497
      %v530 = vpack.c.b16 %v515, %v514
      %v531 = vpack.c.b16 %v517, %v516
      %v532 = vpack.c.b16 %v519, %v518
      %v533 = vpack.c.b16 %v521, %v520
      %v534 = vpack.c.b16 %v523, %v522
      %v535 = vpack.c.b16 %v525, %v524
      %v536 = vpack.c.b16 %v527, %v526
      %v537 = vpack.c.b16 %v529, %v528
      %vm538 = vcmask 523264
      %v540 = vsel %vm538, %v530, 0
      %v543 = vsel %vm538, %v531, 0
      %v546 = vsel %vm538, %v532, 0
      %v549 = vsel %vm538, %v533, 0
      %v552 = vsel %vm538, %v534, 0
      %v555 = vsel %vm538, %v535, 0
      %v558 = vsel %vm538, %v536, 0
      %v561 = vsel %vm538, %v537, 0
      %563 = vmatprep.subr.bf16.mxu0 0
      %564 = vmatpush1.bf16.msra.mxu0 0
      %565 = vmatprep.subr.bf16.mxu0 0
      %566 = vmatpush1.bf16.msra.mxu0 0
      %567 = vmatprep.subr.bf16.mxu0 0
      %568 = vmatpush1.bf16.msra.mxu0 0
      %569 = vmatprep.subr.bf16.mxu0 0
      %570 = vmatpush1.bf16.msra.mxu0 0
      %571 = vmatprep.subr.bf16.mxu0 0
      %572 = vmatpush1.bf16.msra.mxu0 %v481
      %573 = vmatprep.subr.bf16.mxu0 0
      %574 = vmatpush1.bf16.msra.mxu0 %v480
      %575 = vmatprep.subr.bf16.mxu0 0
      %576 = vmatpush1.bf16.msra.mxu0 %v479
      %577 = vmatprep.subr.bf16.mxu0 0
      %578 = vmatpush1.bf16.msra.mxu0 %v478
      %579 = vmatprep.subr.bf16.mxu0 0
      %580 = vmatpush2.bf16.msra.mxu0 0
      %581 = vmatprep.subr.bf16.mxu0 0
      %582 = vmatpush2.bf16.msra.mxu0 0
      %583 = vmatprep.subr.bf16.mxu0 0
      %584 = vmatpush2.bf16.msra.mxu0 0
      %585 = vmatprep.subr.bf16.mxu0 0
      %586 = vmatpush2.bf16.msra.mxu0 0
      %587 = vmatprep.subr.bf16.mxu0 0
      %588 = vmatpush2.bf16.msra.mxu0 0
      %589 = vmatprep.subr.bf16.mxu0 0
      %590 = vmatpush2.bf16.msra.mxu0 0
      %591 = vmatprep.subr.bf16.mxu0 0
      %592 = vmatpush2.bf16.msra.mxu0 0
      %593 = vmatprep.subr.bf16.mxu0 0
      %594 = vmatpush2.bf16.msra.mxu0 0
      %595 = vmatprep.mubr.bf16.mxu0 0
      %596 = vmatmul.mubr.bf16.gmra.mxu0 %v540
      %v597 = vpop.f32.mrf.mxu0
      %v598 = vadd.f32 0.0, %v597
      %v599 = vpop.f32.mrf.mxu0
      %v600 = vpop.f32.mrf.mxu0
      %v601 = vadd.f32 0.0, %v600
      %v602 = vpop.f32.mrf.mxu0
      %603 = vmatprep.mubr.bf16.mxu0 0
      %604 = vmatmul.mubr.bf16.gmra.mxu0 %v543
      %v605 = vpop.f32.mrf.mxu0
      %v606 = vadd.f32 0.0, %v605
      %v607 = vpop.f32.mrf.mxu0
      %v608 = vpop.f32.mrf.mxu0
      %v609 = vadd.f32 0.0, %v608
      %v610 = vpop.f32.mrf.mxu0
      %611 = vmatprep.mubr.bf16.mxu0 0
      %612 = vmatmul.mubr.bf16.gmra.mxu0 %v546
      %v613 = vpop.f32.mrf.mxu0
      %v614 = vadd.f32 0.0, %v613
      %v615 = vpop.f32.mrf.mxu0
      %v616 = vpop.f32.mrf.mxu0
      %v617 = vadd.f32 0.0, %v616
      %v618 = vpop.f32.mrf.mxu0
      %619 = vmatprep.mubr.bf16.mxu0 0
      %620 = vmatmul.mubr.bf16.gmra.mxu0 %v549
      %v621 = vpop.f32.mrf.mxu0
      %v622 = vadd.f32 0.0, %v621
      %v623 = vpop.f32.mrf.mxu0
      %v624 = vpop.f32.mrf.mxu0
      %v625 = vadd.f32 0.0, %v624
      %v626 = vpop.f32.mrf.mxu0
      %627 = vmatprep.mubr.bf16.mxu0 0
      %628 = vmatmul.mubr.bf16.gmra.mxu0 %v552
      %v629 = vpop.f32.mrf.mxu0
      %v630 = vadd.f32 0.0, %v629
      %v631 = vpop.f32.mrf.mxu0
      %v632 = vpop.f32.mrf.mxu0
      %v633 = vadd.f32 0.0, %v632
      %v634 = vpop.f32.mrf.mxu0
      %635 = vmatprep.mubr.bf16.mxu0 0
      %636 = vmatmul.mubr.bf16.gmra.mxu0 %v555
      %v637 = vpop.f32.mrf.mxu0
      %v638 = vadd.f32 0.0, %v637
      %v639 = vpop.f32.mrf.mxu0
      %v640 = vpop.f32.mrf.mxu0
      %v641 = vadd.f32 0.0, %v640
      %v642 = vpop.f32.mrf.mxu0
      %643 = vmatprep.mubr.bf16.mxu0 0
      %644 = vmatmul.mubr.bf16.gmra.mxu0 %v558
      %v645 = vpop.f32.mrf.mxu0
      %v646 = vadd.f32 0.0, %v645
      %v647 = vpop.f32.mrf.mxu0
      %v648 = vpop.f32.mrf.mxu0
      %v649 = vadd.f32 0.0, %v648
      %v650 = vpop.f32.mrf.mxu0
      %651 = vmatprep.mubr.bf16.mxu0 0
      %652 = vmatmul.mubr.bf16.gmra.mxu0 %v561
      %v653 = vpop.f32.mrf.mxu0
      %v654 = vadd.f32 0.0, %v653
      %v655 = vpop.f32.mrf.mxu0
      %v656 = vpop.f32.mrf.mxu0
      %v657 = vadd.f32 0.0, %v656
      %v658 = vpop.f32.mrf.mxu0
      %659 = vdwg.mxu0
      %v660 = vld [vmem:[%s4] sm:$0xff]
      %v661 = vld [vmem:[%s4 + $0x8] sm:$0xff]
      %v662 = vld [vmem:[%s4 + $0x10] sm:$0xff]
      %v663 = vld [vmem:[%s4 + $0x18] sm:$0xff]
      %v664 = vld [vmem:[%s4 + $0x20] sm:$0xff]
      %v665 = vld [vmem:[%s4 + $0x28] sm:$0xff]
      %v666 = vld [vmem:[%s4 + $0x30] sm:$0xff]
      %v667 = vld [vmem:[%s4 + $0x38] sm:$0xff]
      %v668 = vld [vmem:[%s4 + $0x40] sm:$0xff]
      %v669 = vld [vmem:[%s4 + $0x48] sm:$0xff]
      %v670 = vld [vmem:[%s4 + $0x50] sm:$0xff]
      %v671 = vld [vmem:[%s4 + $0x58] sm:$0xff]
      %v672 = vld [vmem:[%s4 + $0x60] sm:$0xff]
      %v673 = vld [vmem:[%s4 + $0x68] sm:$0xff]
      %v674 = vld [vmem:[%s4 + $0x70] sm:$0xff]
      %v675 = vld [vmem:[%s4 + $0x78] sm:$0xff]
      %677 = vset.pattern.permute.xlu0 0
      %678 = vperm.xlu0 %677, %v660
      %v679 = vpop.permute.xlu0 %678
      %682 = vset.pattern.permute.xlu0 0
      %683 = vperm.xlu0 %682, %v661
      %v684 = vpop.permute.xlu0 %683
      %687 = vset.pattern.permute.xlu0 0
      %688 = vperm.xlu0 %687, %v662
      %v689 = vpop.permute.xlu0 %688
      %692 = vset.pattern.permute.xlu0 0
      %693 = vperm.xlu0 %692, %v663
      %v694 = vpop.permute.xlu0 %693
      %697 = vset.pattern.permute.xlu0 0
      %698 = vperm.xlu0 %697, %v664
      %v699 = vpop.permute.xlu0 %698
      %702 = vset.pattern.permute.xlu0 0
      %703 = vperm.xlu0 %702, %v665
      %v704 = vpop.permute.xlu0 %703
      %707 = vset.pattern.permute.xlu0 0
      %708 = vperm.xlu0 %707, %v666
      %v709 = vpop.permute.xlu0 %708
      %712 = vset.pattern.permute.xlu0 0
      %713 = vperm.xlu0 %712, %v667
      %v714 = vpop.permute.xlu0 %713
      %717 = vset.pattern.permute.xlu0 0
      %718 = vperm.xlu0 %717, %v668
      %v719 = vpop.permute.xlu0 %718
      %722 = vset.pattern.permute.xlu0 0
      %723 = vperm.xlu0 %722, %v669
      %v724 = vpop.permute.xlu0 %723
      %727 = vset.pattern.permute.xlu0 0
      %728 = vperm.xlu0 %727, %v670
      %v729 = vpop.permute.xlu0 %728
      %732 = vset.pattern.permute.xlu0 0
      %733 = vperm.xlu0 %732, %v671
      %v734 = vpop.permute.xlu0 %733
      %737 = vset.pattern.permute.xlu0 0
      %738 = vperm.xlu0 %737, %v672
      %v739 = vpop.permute.xlu0 %738
      %742 = vset.pattern.permute.xlu0 0
      %743 = vperm.xlu0 %742, %v673
      %v744 = vpop.permute.xlu0 %743
      %747 = vset.pattern.permute.xlu0 0
      %748 = vperm.xlu0 %747, %v674
      %v749 = vpop.permute.xlu0 %748
      %752 = vset.pattern.permute.xlu0 0
      %753 = vperm.xlu0 %752, %v675
      %v754 = vpop.permute.xlu0 %753
      %v756 = vmul.f32 %v598, %v679
      %v757 = vmul.f32 %v601, %v684
      %v758 = vmul.f32 %v606, %v689
      %v759 = vmul.f32 %v609, %v694
      %v760 = vmul.f32 %v614, %v699
      %v761 = vmul.f32 %v617, %v704
      %v762 = vmul.f32 %v622, %v709
      %v763 = vmul.f32 %v625, %v714
      %v764 = vmul.f32 %v630, %v719
      %v765 = vmul.f32 %v633, %v724
      %v766 = vmul.f32 %v638, %v729
      %v767 = vmul.f32 %v641, %v734
      %v768 = vmul.f32 %v646, %v739
      %v769 = vmul.f32 %v649, %v744
      %v770 = vmul.f32 %v654, %v749
      %v771 = vmul.f32 %v657, %v754
      %v772 = vld [vmem:[%s5] sm:$0xff]
      %v773 = vld [vmem:[%s5 + $0x8] sm:$0xff]
      %v774 = vld [vmem:[%s5 + $0x10] sm:$0xff]
      %v775 = vld [vmem:[%s5 + $0x18] sm:$0xff]
      %v776 = vld [vmem:[%s5 + $0x20] sm:$0xff]
      %v777 = vld [vmem:[%s5 + $0x28] sm:$0xff]
      %v778 = vld [vmem:[%s5 + $0x30] sm:$0xff]
      %v779 = vld [vmem:[%s5 + $0x38] sm:$0xff]
      %v780 = vld [vmem:[%s5 + $0x40] sm:$0xff]
      %v781 = vld [vmem:[%s5 + $0x48] sm:$0xff]
      %v782 = vld [vmem:[%s5 + $0x50] sm:$0xff]
      %v783 = vld [vmem:[%s5 + $0x58] sm:$0xff]
      %v784 = vld [vmem:[%s5 + $0x60] sm:$0xff]
      %v785 = vld [vmem:[%s5 + $0x68] sm:$0xff]
      %v786 = vld [vmem:[%s5 + $0x70] sm:$0xff]
      %v787 = vld [vmem:[%s5 + $0x78] sm:$0xff]
      %789 = vset.pattern.permute.xlu0 0
      %790 = vperm.xlu0 %789, %v772
      %v791 = vpop.permute.xlu0 %790
      %794 = vset.pattern.permute.xlu0 0
      %795 = vperm.xlu0 %794, %v773
      %v796 = vpop.permute.xlu0 %795
      %799 = vset.pattern.permute.xlu0 0
      %800 = vperm.xlu0 %799, %v774
      %v801 = vpop.permute.xlu0 %800
      %804 = vset.pattern.permute.xlu0 0
      %805 = vperm.xlu0 %804, %v775
      %v806 = vpop.permute.xlu0 %805
      %809 = vset.pattern.permute.xlu0 0
      %810 = vperm.xlu0 %809, %v776
      %v811 = vpop.permute.xlu0 %810
      %814 = vset.pattern.permute.xlu0 0
      %815 = vperm.xlu0 %814, %v777
      %v816 = vpop.permute.xlu0 %815
      %819 = vset.pattern.permute.xlu0 0
      %820 = vperm.xlu0 %819, %v778
      %v821 = vpop.permute.xlu0 %820
      %824 = vset.pattern.permute.xlu0 0
      %825 = vperm.xlu0 %824, %v779
      %v826 = vpop.permute.xlu0 %825
      %829 = vset.pattern.permute.xlu0 0
      %830 = vperm.xlu0 %829, %v780
      %v831 = vpop.permute.xlu0 %830
      %834 = vset.pattern.permute.xlu0 0
      %835 = vperm.xlu0 %834, %v781
      %v836 = vpop.permute.xlu0 %835
      %839 = vset.pattern.permute.xlu0 0
      %840 = vperm.xlu0 %839, %v782
      %v841 = vpop.permute.xlu0 %840
      %844 = vset.pattern.permute.xlu0 0
      %845 = vperm.xlu0 %844, %v783
      %v846 = vpop.permute.xlu0 %845
      %849 = vset.pattern.permute.xlu0 0
      %850 = vperm.xlu0 %849, %v784
      %v851 = vpop.permute.xlu0 %850
      %854 = vset.pattern.permute.xlu0 0
      %855 = vperm.xlu0 %854, %v785
      %v856 = vpop.permute.xlu0 %855
      %859 = vset.pattern.permute.xlu0 0
      %860 = vperm.xlu0 %859, %v786
      %v861 = vpop.permute.xlu0 %860
      %864 = vset.pattern.permute.xlu0 0
      %865 = vperm.xlu0 %864, %v787
      %v866 = vpop.permute.xlu0 %865
      %v868 = vadd.f32 %v756, %v791
      %v869 = vadd.f32 %v757, %v796
      %v870 = vadd.f32 %v758, %v801
      %v871 = vadd.f32 %v759, %v806
      %v872 = vadd.f32 %v760, %v811
      %v873 = vadd.f32 %v761, %v816
      %v874 = vadd.f32 %v762, %v821
      %v875 = vadd.f32 %v763, %v826
      %v876 = vadd.f32 %v764, %v831
      %v877 = vadd.f32 %v765, %v836
      %v878 = vadd.f32 %v766, %v841
      %v879 = vadd.f32 %v767, %v846
      %v880 = vadd.f32 %v768, %v851
      %v881 = vadd.f32 %v769, %v856
      %v882 = vadd.f32 %v770, %v861
      %v883 = vadd.f32 %v771, %v866
      %v884 = vpack.c.bf16 %v869, %v868
      %v885 = vpack.c.bf16 %v871, %v870
      %v886 = vpack.c.bf16 %v873, %v872
      %v887 = vpack.c.bf16 %v875, %v874
      %v888 = vpack.c.bf16 %v877, %v876
      %v889 = vpack.c.bf16 %v879, %v878
      %v890 = vpack.c.bf16 %v881, %v880
      %v891 = vpack.c.bf16 %v883, %v882
      %v892 = vmul.bf16 %v884, 1045249613
      %v893 = vmul.bf16 %v885, 1045249613
      %v894 = vmul.bf16 %v886, 1045249613
      %v895 = vmul.bf16 %v887, 1045249613
      %v896 = vmul.bf16 %v888, 1045249613
      %v897 = vmul.bf16 %v889, 1045249613
      %v898 = vmul.bf16 %v890, 1045249613
      %v899 = vmul.bf16 %v891, 1045249613
      %v900 = vmax.bf16 %v884, %v892
      %v901 = vmax.bf16 %v885, %v893
      %v902 = vmax.bf16 %v886, %v894
      %v903 = vmax.bf16 %v887, %v895
      %v904 = vmax.bf16 %v888, %v896
      %v905 = vmax.bf16 %v889, %v897
      %v906 = vmax.bf16 %v890, %v898
      %v907 = vmax.bf16 %v891, %v899
      %v908 = vld [vmem:[%s6] sm:$0x1]
      %909 = vmatprep.subr.bf16.mxu0 0
      %910 = vmatpush1.bf16.msra.mxu0 %v907
      %911 = vmatprep.subr.bf16.mxu0 0
      %912 = vmatpush1.bf16.msra.mxu0 %v906
      %913 = vmatprep.subr.bf16.mxu0 0
      %914 = vmatpush1.bf16.msra.mxu0 %v905
      %915 = vmatprep.subr.bf16.mxu0 0
      %916 = vmatpush1.bf16.msra.mxu0 %v904
      %917 = vmatprep.subr.bf16.mxu0 0
      %918 = vmatpush1.bf16.msra.mxu0 %v903
      %919 = vmatprep.subr.bf16.mxu0 0
      %920 = vmatpush1.bf16.msra.mxu0 %v902
      %921 = vmatprep.subr.bf16.mxu0 0
      %922 = vmatpush1.bf16.msra.mxu0 %v901
      %923 = vmatprep.subr.bf16.mxu0 0
      %924 = vmatpush1.bf16.msra.mxu0 %v900
      %925 = vmatprep.subr.bf16.mxu0 0
      %926 = vmatpush2.bf16.msra.mxu0 0
      %927 = vmatprep.subr.bf16.mxu0 0
      %928 = vmatpush2.bf16.msra.mxu0 0
      %929 = vmatprep.subr.bf16.mxu0 0
      %930 = vmatpush2.bf16.msra.mxu0 0
      %931 = vmatprep.subr.bf16.mxu0 0
      %932 = vmatpush2.bf16.msra.mxu0 0
      %933 = vmatprep.subr.bf16.mxu0 0
      %934 = vmatpush2.bf16.msra.mxu0 0
      %935 = vmatprep.subr.bf16.mxu0 0
      %936 = vmatpush2.bf16.msra.mxu0 0
      %937 = vmatprep.subr.bf16.mxu0 0
      %938 = vmatpush2.bf16.msra.mxu0 0
      %939 = vmatprep.subr.bf16.mxu0 0
      %940 = vmatpush2.bf16.msra.mxu0 0
      %941 = vmatprep.mubr.bf16.mxu0 0
      %942 = vmatmul.mubr.bf16.gmra.mxu0 %v908
      %v943 = vpop.f32.mrf.mxu0
      %v944 = vadd.f32 0.0, %v943
      %v945 = vpop.f32.mrf.mxu0
      %v946 = vpop.f32.mrf.mxu0
      %v947 = vpop.f32.mrf.mxu0
      %948 = vdwg.mxu0
      %949 = vst [vmem:[%s307] sm:$0x1] %v944
      %p950 = scmp.lt.s32.totalorder %s22, 1
      %s951 = scalar_select %p950, %s22, 1
      %p952 = scmp.lt.s32.totalorder %s23, 1
      %s953 = scalar_select %p952, %s23, 1
      %s954 = smul.addr %s951, 2
      %s955 = sadd.s32 %s953, %s954
      %s956 = scalar_lea.vmem %s7, %s955
      // Predicated region
      $region49: #{pixel_discriminator_forward.1} parent=47 // pred_check
        %p957 = pneg %p204
      $region50: #{pixel_discriminator_forward.1} parent=47 // pred_check_branch
        %959 = sbr.rel (%p957) target = $region52
      $region51: #{pixel_discriminator_forward.1} parent=47 // pred_region
        _
      $region52: #{pixel_discriminator_forward.1} parent=47 // pred_fallthru
        _
    $region48: #{pixel_discriminator_forward.1} parent=5 // pred_fallthru
      _
    %p960 = scmp.le.s32.totalorder 2, %s13
    // Predicated region
    $region53: #{pixel_discriminator_forward.1} parent=5 // pred_check
      %p961 = pneg %p960
    $region54: #{pixel_discriminator_forward.1} parent=5 // pred_check_branch
      %963 = sbr.rel (%p961) target = $region56
    $region55: #{pixel_discriminator_forward.1} parent=5 // pred_region
      %s964 = ssub.s32 %s13, 2
      // Predicated region
      $region57: #{pixel_discriminator_forward.1} parent=55 // pred_check
        %p965 = pneg %p210
      $region58: #{pixel_discriminator_forward.1} parent=55 // pred_check_branch
        %967 = sbr.rel (%p965) target = $region60
      $region59: #{pixel_discriminator_forward.1} parent=55 // pred_region
        %p968 = scmp.lt.s32.totalorder %s24, 1
        %s969 = scalar_select %p968, %s24, 1
        %p970 = scmp.lt.s32.totalorder %s25, 1
        %s971 = scalar_select %p970, %s25, 1
        %s972 = smul.addr %s969, 2
        %s973 = sadd.s32 %s971, %s972
        %s974 = scalar_lea.vmem %s7, %s973
      $region60: #{pixel_discriminator_forward.1} parent=55 // pred_fallthru
        _
    $region56: #{pixel_discriminator_forward.1} parent=5 // pred_fallthru
      _
  $region6: #{pixel_discriminator_forward.1} parent=0 // loop_footer
    %s17 = sadd.s32 1, %s13
  $region7: #{pixel_discriminator_forward.1} parent=0 // loop_footer_branch
    %12 = sbr.rel target = $region3
  $region8: #{pixel_discriminator_forward.1} parent=0 // loop_exit
    _

</llo_original>
